<compile_context>
chip_gen: v7x
topology: tpu7x:2x2x1
jax: 0.10.0
libtpu: 0.0.40
codegen_flags: <defaults>
</compile_context>

<pallas_src>
import functools

import jax
import jax.numpy as jnp
from jax.experimental import pallas as pl
from jax.experimental.pallas import tpu as pltpu

NEMB = 112          # channel width of the module
HID = 4 * NEMB      # 448
NHEAD = 2
LN_EPS = 1e-5


def _round_up(n, m):
    return ((n + m - 1) // m) * m


def _block_kernel(x_ref,
                  ln1w_ref, ln1b_ref,
                  pw_ref, pb_ref,
                  ln2w_ref, ln2b_ref,
                  w1_ref, b1_ref,
                  w2_ref, b2_ref,
                  o_ref,
                  *, rows, tm, ffn_bf16):
    inv_c = 1.0 / NEMB

    x = x_ref[...]                                   # (tm, 112) f32
    if rows % tm != 0:
        # Last tile overhangs past `rows`; zero the garbage rows.  (All math is
        # row-wise and overhang output stores are discarded, so this is purely
        # defensive, and it is only emitted when a remainder tile exists.)
        base = pl.program_id(0) * tm
        row_ids = base + jax.lax.broadcasted_iota(jnp.int32, (tm, 1), 0)
        x = jnp.where(row_ids < rows, x, 0.0)

    # --- ln_1 (two-pass variance for numerical safety) ---
    mu1 = jnp.sum(x, axis=-1, keepdims=True) * inv_c
    xc1 = x - mu1
    var1 = jnp.sum(xc1 * xc1, axis=-1, keepdims=True) * inv_c
    h1 = xc1 * jax.lax.rsqrt(var1 + LN_EPS)
    h1 = h1 * ln1w_ref[...] + ln1b_ref[...]

    # --- "attention" branch == proj linear (heads are dead code in the reference) ---
    a = jnp.dot(h1.astype(jnp.bfloat16), pw_ref[...],
                preferred_element_type=jnp.float32) + pb_ref[...]
    x1 = x + a                                       # first residual

    # --- ln_2 ---
    mu2 = jnp.sum(x1, axis=-1, keepdims=True) * inv_c
    xc2 = x1 - mu2
    var2 = jnp.sum(xc2 * xc2, axis=-1, keepdims=True) * inv_c
    h2 = xc2 * jax.lax.rsqrt(var2 + LN_EPS)
    h2 = h2 * ln2w_ref[...] + ln2b_ref[...]

    # --- feed-forward: Linear(C,4C) -> ReLU -> Linear(4C,C); bf16 MXU, f32 accumulate ---
    h2b = h2.astype(jnp.bfloat16)
    if ffn_bf16:
        # v6e/v7x: bf16 VALU — keep the (tm, 448) hidden activation in bf16.
        z = jnp.dot(h2b, w1_ref[...], preferred_element_type=jnp.bfloat16)
        z = jnp.maximum(z + b1_ref[...].astype(jnp.bfloat16), 0.0)
        f = jnp.dot(z, w2_ref[...], preferred_element_type=jnp.float32) + b2_ref[...]
    else:
        # v5e (no bf16 VALU): f32 epilogue.
        z = jnp.dot(h2b, w1_ref[...], preferred_element_type=jnp.float32) + b1_ref[...]
        z = jnp.maximum(z, 0.0)
        f = jnp.dot(z.astype(jnp.bfloat16), w2_ref[...],
                    preferred_element_type=jnp.float32) + b2_ref[...]

    o_ref[...] = (x1 + f).astype(o_ref.dtype)        # second residual


@functools.partial(jax.jit, static_argnames=("tm", "ffn_bf16"))
def block_forward(x, params, *, tm=512, ffn_bf16=False):
    """x: (B, T, C=112) float32.  params: kernel params (see prepare_kernel_params)."""
    B, T, C = x.shape
    assert C == NEMB
    rows = B * T
    xr = x.reshape(rows, C).astype(jnp.float32)      # free reshape, no padding

    # Adaptive row tile: cap at `tm`, but when rows allow it make the grid have
    # at least 2 steps (so the "parallel" axis can shard across both v7x
    # TensorCores), and keep tm a multiple of 8 sublanes.
    tm_eff = max(8, min(tm, _round_up(pl.cdiv(rows, 2), 8)))
    grid = pl.cdiv(rows, tm_eff)

    kernel = functools.partial(_block_kernel, rows=rows, tm=tm_eff, ffn_bf16=ffn_bf16)

    row_spec = pl.BlockSpec((tm_eff, NEMB), lambda i: (i, 0))
    full = lambda r, c: pl.BlockSpec((r, c), lambda i: (0, 0))

    matmul_macs = NEMB * NEMB + 2 * NEMB * HID
    weight_bytes = 2 * matmul_macs + 4 * (6 * NEMB + HID)
    cost = pl.CostEstimate(
        flops=2 * rows * matmul_macs,
        transcendentals=2 * rows,                     # one rsqrt per LN per row
        bytes_accessed=rows * NEMB * 4 * 2 + weight_bytes)

    out = pl.pallas_call(
        kernel,
        out_shape=jax.ShapeDtypeStruct((rows, NEMB), jnp.float32),
        grid_spec=pltpu.PrefetchScalarGridSpec(
            num_scalar_prefetch=0,
            grid=(grid,),
            in_specs=[
                row_spec,                             # x tile (tm, 112)
                full(1, NEMB), full(1, NEMB),         # ln1 weight / bias (f32)
                full(NEMB, NEMB), full(1, NEMB),      # proj W^T (bf16) / bias (f32)
                full(1, NEMB), full(1, NEMB),         # ln2 weight / bias (f32)
                full(NEMB, HID), full(1, HID),        # ffn W1^T (bf16) / b1 (f32)
                full(HID, NEMB), full(1, NEMB),       # ffn W2^T (bf16) / b2 (f32)
            ],
            out_specs=row_spec,
        ),
        compiler_params=pltpu.CompilerParams(
            dimension_semantics=("parallel",),
            vmem_limit_bytes=32 * 1024 * 1024),
        cost_estimate=cost,
    )(
        xr,
        params["ln1_w"], params["ln1_b"],
        params["proj_wT"], params["proj_b"],
        params["ln2_w"], params["ln2_b"],
        params["ffn_w1T"], params["ffn_b1"],
        params["ffn_w2T"], params["ffn_b2"],
    )
    return out.reshape(B, T, C)


def init_params(key, nemb=NEMB):
    """Deterministic synthetic parameters matching the PyTorch module shapes.

    Linear weights are stored pre-transposed as (in, out) so the kernel can do
    y = x @ W^T directly (PyTorch stores (out, in))."""
    hidden = 4 * nemb
    ks = jax.random.split(key, 6)
    scale = 0.02
    return {
        "ln1_w": jnp.ones((1, nemb), jnp.float32),
        "ln1_b": jnp.zeros((1, nemb), jnp.float32),
        "proj_wT": scale * jax.random.normal(ks[0], (nemb, nemb), jnp.float32),
        "proj_b": scale * jax.random.normal(ks[1], (1, nemb), jnp.float32),
        "ln2_w": jnp.ones((1, nemb), jnp.float32),
        "ln2_b": jnp.zeros((1, nemb), jnp.float32),
        "ffn_w1T": scale * jax.random.normal(ks[2], (nemb, hidden), jnp.float32),
        "ffn_b1": scale * jax.random.normal(ks[3], (1, hidden), jnp.float32),
        "ffn_w2T": scale * jax.random.normal(ks[4], (hidden, nemb), jnp.float32),
        "ffn_b2": scale * jax.random.normal(ks[5], (1, nemb), jnp.float32),
    }


def prepare_kernel_params(p):
    """Cast matmul weights to bf16 (MXU inputs); LN params and biases stay f32.

    No padding: the kernel works at the true 112/448 widths (bf16 weights bound
    accuracy to roughly 1e-2 relative, matching the test tolerance)."""
    return {
        "ln1_w": p["ln1_w"].astype(jnp.float32),
        "ln1_b": p["ln1_b"].astype(jnp.float32),
        "proj_wT": p["proj_wT"].astype(jnp.bfloat16),
        "proj_b": p["proj_b"].astype(jnp.float32),
        "ln2_w": p["ln2_w"].astype(jnp.float32),
        "ln2_b": p["ln2_b"].astype(jnp.float32),
        "ffn_w1T": p["ffn_w1T"].astype(jnp.bfloat16),
        "ffn_b1": p["ffn_b1"].astype(jnp.float32),
        "ffn_w2T": p["ffn_w2T"].astype(jnp.bfloat16),
        "ffn_b2": p["ffn_b2"].astype(jnp.float32),
    }


def _supports_bf16_valu():
    """bf16 VALU exists on v6e/v7x but not v5e; be conservative otherwise."""
    try:
        kind = jax.devices()[0].device_kind.lower()
    except Exception:
        return False
    return ("v6" in kind) or ("v7" in kind) or ("7x" in kind)


def _reference(x, kp):
    """Pure-JAX reference of the Block forward (eval mode), for validation.

    Uses the same (bf16-quantized) matmul weights as the kernel, dequantized to
    f32, so the remaining difference is the in-kernel bf16 activation casts."""
    def ln(v, w, b):
        mu = jnp.mean(v, axis=-1, keepdims=True)
        var = jnp.mean(jnp.square(v - mu), axis=-1, keepdims=True)
        return (v - mu) * jax.lax.rsqrt(var + LN_EPS) * w + b

    pw = kp["proj_wT"].astype(jnp.float32)
    w1 = kp["ffn_w1T"].astype(jnp.float32)
    w2 = kp["ffn_w2T"].astype(jnp.float32)

    h1 = ln(x, kp["ln1_w"][0], kp["ln1_b"][0])
    x1 = x + (h1 @ pw + kp["proj_b"][0])
    h2 = ln(x1, kp["ln2_w"][0], kp["ln2_b"][0])
    f = jnp.maximum(h2 @ w1 + kp["ffn_b1"][0], 0.0) @ w2 + kp["ffn_b2"][0]
    return x1 + f


if __name__ == "__main__":
    key = jax.random.PRNGKey(0)
    kx, kp = jax.random.split(key)

    B, T = 2, 8            # T <= blocksiz (128); nemb fixed at 112 by the module
    x = jax.random.normal(kx, (B, T, NEMB), jnp.float32)
    raw_params = init_params(kp)
    kernel_params = prepare_kernel_params(raw_params)

    use_bf16_ffn = _supports_bf16_valu()
    out = block_forward(x, kernel_params, ffn_bf16=use_bf16_ffn)
    out = jax.block_until_ready(out)

    ref = _reference(x, kernel_params)
    assert out.shape == (B, T, NEMB)
    max_err = float(jnp.max(jnp.abs(out - ref)))
    assert jnp.allclose(out, ref, atol=2e-2, rtol=2e-2), f"mismatch vs reference (max err {max_err})"

    print("KERNEL_OK")
</pallas_src>

<mosaic_0001>
module attributes {stable_mosaic.version = 11 : i64} {
  func.func @_block_kernel(%arg0: i32, %arg1: memref<8x112xf32, #tpu.memory_space<vmem>>, %arg2: memref<1x112xf32, #tpu.memory_space<vmem>>, %arg3: memref<1x112xf32, #tpu.memory_space<vmem>>, %arg4: memref<112x112xbf16, #tpu.memory_space<vmem>>, %arg5: memref<1x112xf32, #tpu.memory_space<vmem>>, %arg6: memref<1x112xf32, #tpu.memory_space<vmem>>, %arg7: memref<1x112xf32, #tpu.memory_space<vmem>>, %arg8: memref<112x448xbf16, #tpu.memory_space<vmem>>, %arg9: memref<1x448xf32, #tpu.memory_space<vmem>>, %arg10: memref<448x112xbf16, #tpu.memory_space<vmem>>, %arg11: memref<1x112xf32, #tpu.memory_space<vmem>>, %arg12: memref<8x112xf32, #tpu.memory_space<vmem>>) attributes {dimension_semantics = [#tpu.dimension_semantics<parallel>], iteration_bounds = array<i64: 2>, scalar_prefetch = 0 : i64, scratch_operands = 0 : i64, tpu.core_type = #tpu.core_type<tc>, window_params = [{transform_indices = @transform_0, window_bounds = array<i64: 8, 112>}, {pipeline_mode = #tpu.pipeline_mode<synchronous>, transform_indices = @transform_1, window_bounds = array<i64: 1, 112>}, {pipeline_mode = #tpu.pipeline_mode<synchronous>, transform_indices = @transform_2, window_bounds = array<i64: 1, 112>}, {pipeline_mode = #tpu.pipeline_mode<synchronous>, transform_indices = @transform_3, window_bounds = array<i64: 112, 112>}, {pipeline_mode = #tpu.pipeline_mode<synchronous>, transform_indices = @transform_4, window_bounds = array<i64: 1, 112>}, {pipeline_mode = #tpu.pipeline_mode<synchronous>, transform_indices = @transform_5, window_bounds = array<i64: 1, 112>}, {pipeline_mode = #tpu.pipeline_mode<synchronous>, transform_indices = @transform_6, window_bounds = array<i64: 1, 112>}, {pipeline_mode = #tpu.pipeline_mode<synchronous>, transform_indices = @transform_7, window_bounds = array<i64: 112, 448>}, {pipeline_mode = #tpu.pipeline_mode<synchronous>, transform_indices = @transform_8, window_bounds = array<i64: 1, 448>}, {pipeline_mode = #tpu.pipeline_mode<synchronous>, transform_indices = @transform_9, window_bounds = array<i64: 448, 112>}, {pipeline_mode = #tpu.pipeline_mode<synchronous>, transform_indices = @transform_10, window_bounds = array<i64: 1, 112>}, {transform_indices = @transform_11, window_bounds = array<i64: 8, 112>}]} {
    %c0 = arith.constant 0 : index
    %c0_0 = arith.constant 0 : index
    %0 = vector.load %arg1[%c0, %c0_0] : memref<8x112xf32, #tpu.memory_space<vmem>>, vector<8x112xf32>
    %cst = arith.constant dense<0.000000e+00> : vector<8xf32>
    %1 = vector.multi_reduction <add>, %0, %cst [1] : vector<8x112xf32> to vector<8xf32>
    %2 = vector.shape_cast %1 : vector<8xf32> to vector<8x1xf32>
    %cst_1 = arith.constant 0.00892857183 : f32
    %3 = vector.broadcast %cst_1 : f32 to vector<8x1xf32>
    %4 = arith.mulf %2, %3 : vector<8x1xf32>
    %5 = vector.broadcast %4 : vector<8x1xf32> to vector<8x112xf32>
    %6 = arith.subf %0, %5 : vector<8x112xf32>
    %7 = arith.mulf %6, %6 : vector<8x112xf32>
    %cst_2 = arith.constant dense<0.000000e+00> : vector<8xf32>
    %8 = vector.multi_reduction <add>, %7, %cst_2 [1] : vector<8x112xf32> to vector<8xf32>
    %9 = vector.shape_cast %8 : vector<8xf32> to vector<8x1xf32>
    %cst_3 = arith.constant 0.00892857183 : f32
    %10 = vector.broadcast %cst_3 : f32 to vector<8x1xf32>
    %11 = arith.mulf %9, %10 : vector<8x1xf32>
    %cst_4 = arith.constant 9.99999974E-6 : f32
    %12 = vector.broadcast %cst_4 : f32 to vector<8x1xf32>
    %13 = arith.addf %11, %12 : vector<8x1xf32>
    %14 = math.rsqrt %13 : vector<8x1xf32>
    %15 = vector.broadcast %14 : vector<8x1xf32> to vector<8x112xf32>
    %16 = arith.mulf %6, %15 : vector<8x112xf32>
    %c0_5 = arith.constant 0 : index
    %c0_6 = arith.constant 0 : index
    %17 = vector.load %arg2[%c0_5, %c0_6] : memref<1x112xf32, #tpu.memory_space<vmem>>, vector<1x112xf32>
    %18 = vector.broadcast %17 : vector<1x112xf32> to vector<8x112xf32>
    %19 = arith.mulf %16, %18 : vector<8x112xf32>
    %c0_7 = arith.constant 0 : index
    %c0_8 = arith.constant 0 : index
    %20 = vector.load %arg3[%c0_7, %c0_8] : memref<1x112xf32, #tpu.memory_space<vmem>>, vector<1x112xf32>
    %21 = vector.broadcast %20 : vector<1x112xf32> to vector<8x112xf32>
    %22 = arith.addf %19, %21 : vector<8x112xf32>
    %23 = arith.truncf %22 : vector<8x112xf32> to vector<8x112xbf16>
    %c0_9 = arith.constant 0 : index
    %c0_10 = arith.constant 0 : index
    %24 = vector.load %arg4[%c0_9, %c0_10] : memref<112x112xbf16, #tpu.memory_space<vmem>>, vector<112x112xbf16>
    %cst_11 = arith.constant dense<0.000000e+00> : vector<8x112xf32>
    %25 = tpu.matmul %23, %24, %cst_11 {dimension_numbers = #tpu.dot_dimension_numbers<[1], [0], [0], [1], [0, 0, 1, 1], [], []>} : vector<8x112xbf16>, vector<112x112xbf16>, vector<8x112xf32> -> vector<8x112xf32>
    %c0_12 = arith.constant 0 : index
    %c0_13 = arith.constant 0 : index
    %26 = vector.load %arg5[%c0_12, %c0_13] : memref<1x112xf32, #tpu.memory_space<vmem>>, vector<1x112xf32>
    %27 = vector.broadcast %26 : vector<1x112xf32> to vector<8x112xf32>
    %28 = arith.addf %25, %27 : vector<8x112xf32>
    %29 = arith.addf %0, %28 : vector<8x112xf32>
    %cst_14 = arith.constant dense<0.000000e+00> : vector<8xf32>
    %30 = vector.multi_reduction <add>, %29, %cst_14 [1] : vector<8x112xf32> to vector<8xf32>
    %31 = vector.shape_cast %30 : vector<8xf32> to vector<8x1xf32>
    %cst_15 = arith.constant 0.00892857183 : f32
    %32 = vector.broadcast %cst_15 : f32 to vector<8x1xf32>
    %33 = arith.mulf %31, %32 : vector<8x1xf32>
    %34 = vector.broadcast %33 : vector<8x1xf32> to vector<8x112xf32>
    %35 = arith.subf %29, %34 : vector<8x112xf32>
    %36 = arith.mulf %35, %35 : vector<8x112xf32>
    %cst_16 = arith.constant dense<0.000000e+00> : vector<8xf32>
    %37 = vector.multi_reduction <add>, %36, %cst_16 [1] : vector<8x112xf32> to vector<8xf32>
    %38 = vector.shape_cast %37 : vector<8xf32> to vector<8x1xf32>
    %cst_17 = arith.constant 0.00892857183 : f32
    %39 = vector.broadcast %cst_17 : f32 to vector<8x1xf32>
    %40 = arith.mulf %38, %39 : vector<8x1xf32>
    %cst_18 = arith.constant 9.99999974E-6 : f32
    %41 = vector.broadcast %cst_18 : f32 to vector<8x1xf32>
    %42 = arith.addf %40, %41 : vector<8x1xf32>
    %43 = math.rsqrt %42 : vector<8x1xf32>
    %44 = vector.broadcast %43 : vector<8x1xf32> to vector<8x112xf32>
    %45 = arith.mulf %35, %44 : vector<8x112xf32>
    %c0_19 = arith.constant 0 : index
    %c0_20 = arith.constant 0 : index
    %46 = vector.load %arg6[%c0_19, %c0_20] : memref<1x112xf32, #tpu.memory_space<vmem>>, vector<1x112xf32>
    %47 = vector.broadcast %46 : vector<1x112xf32> to vector<8x112xf32>
    %48 = arith.mulf %45, %47 : vector<8x112xf32>
    %c0_21 = arith.constant 0 : index
    %c0_22 = arith.constant 0 : index
    %49 = vector.load %arg7[%c0_21, %c0_22] : memref<1x112xf32, #tpu.memory_space<vmem>>, vector<1x112xf32>
    %50 = vector.broadcast %49 : vector<1x112xf32> to vector<8x112xf32>
    %51 = arith.addf %48, %50 : vector<8x112xf32>
    %52 = arith.truncf %51 : vector<8x112xf32> to vector<8x112xbf16>
    %c0_23 = arith.constant 0 : index
    %c0_24 = arith.constant 0 : index
    %53 = vector.load %arg8[%c0_23, %c0_24] : memref<112x448xbf16, #tpu.memory_space<vmem>>, vector<112x448xbf16>
    %cst_25 = arith.constant dense<0.000000e+00> : vector<8x448xf32>
    %54 = tpu.matmul %52, %53, %cst_25 {dimension_numbers = #tpu.dot_dimension_numbers<[1], [0], [0], [1], [0, 0, 1, 1], [], []>} : vector<8x112xbf16>, vector<112x448xbf16>, vector<8x448xf32> -> vector<8x448xf32>
    %c0_26 = arith.constant 0 : index
    %c0_27 = arith.constant 0 : index
    %55 = vector.load %arg9[%c0_26, %c0_27] : memref<1x448xf32, #tpu.memory_space<vmem>>, vector<1x448xf32>
    %56 = vector.broadcast %55 : vector<1x448xf32> to vector<8x448xf32>
    %57 = arith.addf %54, %56 : vector<8x448xf32>
    %cst_28 = arith.constant 0.000000e+00 : f32
    %58 = vector.broadcast %cst_28 : f32 to vector<8x448xf32>
    %59 = arith.maximumf %57, %58 : vector<8x448xf32>
    %60 = arith.truncf %59 : vector<8x448xf32> to vector<8x448xbf16>
    %c0_29 = arith.constant 0 : index
    %c0_30 = arith.constant 0 : index
    %61 = vector.load %arg10[%c0_29, %c0_30] : memref<448x112xbf16, #tpu.memory_space<vmem>>, vector<448x112xbf16>
    %cst_31 = arith.constant dense<0.000000e+00> : vector<8x112xf32>
    %62 = tpu.matmul %60, %61, %cst_31 {dimension_numbers = #tpu.dot_dimension_numbers<[1], [0], [0], [1], [0, 0, 1, 1], [], []>} : vector<8x448xbf16>, vector<448x112xbf16>, vector<8x112xf32> -> vector<8x112xf32>
    %c0_32 = arith.constant 0 : index
    %c0_33 = arith.constant 0 : index
    %63 = vector.load %arg11[%c0_32, %c0_33] : memref<1x112xf32, #tpu.memory_space<vmem>>, vector<1x112xf32>
    %64 = vector.broadcast %63 : vector<1x112xf32> to vector<8x112xf32>
    %65 = arith.addf %62, %64 : vector<8x112xf32>
    %66 = arith.addf %29, %65 : vector<8x112xf32>
    %c0_34 = arith.constant 0 : index
    %c0_35 = arith.constant 0 : index
    %67 = vector.load %arg12[%c0_34, %c0_35] : memref<8x112xf32, #tpu.memory_space<vmem>>, vector<8x112xf32>
    tpu.vector_store %arg12[%c0_34, %c0_35], %66 {strides = array<i32>} : memref<8x112xf32, #tpu.memory_space<vmem>>, vector<8x112xf32>,
    return
  }
  func.func @transform_0(%arg0: i32) -> (i32, i32) {
    %c0_i32 = arith.constant 0 : i32
    %c0_i32_0 = arith.constant 0 : i32
    return %arg0, %c0_i32 : i32, i32
  }
  func.func @transform_1(%arg0: i32) -> (i32, i32) {
    %c0_i32 = arith.constant 0 : i32
    %c0_i32_0 = arith.constant 0 : i32
    %c0_i32_1 = arith.constant 0 : i32
    return %c0_i32, %c0_i32_0 : i32, i32
  }
  func.func @transform_2(%arg0: i32) -> (i32, i32) {
    %c0_i32 = arith.constant 0 : i32
    %c0_i32_0 = arith.constant 0 : i32
    %c0_i32_1 = arith.constant 0 : i32
    return %c0_i32, %c0_i32_0 : i32, i32
  }
  func.func @transform_3(%arg0: i32) -> (i32, i32) {
    %c0_i32 = arith.constant 0 : i32
    %c0_i32_0 = arith.constant 0 : i32
    %c0_i32_1 = arith.constant 0 : i32
    return %c0_i32, %c0_i32_0 : i32, i32
  }
  func.func @transform_4(%arg0: i32) -> (i32, i32) {
    %c0_i32 = arith.constant 0 : i32
    %c0_i32_0 = arith.constant 0 : i32
    %c0_i32_1 = arith.constant 0 : i32
    return %c0_i32, %c0_i32_0 : i32, i32
  }
  func.func @transform_5(%arg0: i32) -> (i32, i32) {
    %c0_i32 = arith.constant 0 : i32
    %c0_i32_0 = arith.constant 0 : i32
    %c0_i32_1 = arith.constant 0 : i32
    return %c0_i32, %c0_i32_0 : i32, i32
  }
  func.func @transform_6(%arg0: i32) -> (i32, i32) {
    %c0_i32 = arith.constant 0 : i32
    %c0_i32_0 = arith.constant 0 : i32
    %c0_i32_1 = arith.constant 0 : i32
    return %c0_i32, %c0_i32_0 : i32, i32
  }
  func.func @transform_7(%arg0: i32) -> (i32, i32) {
    %c0_i32 = arith.constant 0 : i32
    %c0_i32_0 = arith.constant 0 : i32
    %c0_i32_1 = arith.constant 0 : i32
    return %c0_i32, %c0_i32_0 : i32, i32
  }
  func.func @transform_8(%arg0: i32) -> (i32, i32) {
    %c0_i32 = arith.constant 0 : i32
    %c0_i32_0 = arith.constant 0 : i32
    %c0_i32_1 = arith.constant 0 : i32
    return %c0_i32, %c0_i32_0 : i32, i32
  }
  func.func @transform_9(%arg0: i32) -> (i32, i32) {
    %c0_i32 = arith.constant 0 : i32
    %c0_i32_0 = arith.constant 0 : i32
    %c0_i32_1 = arith.constant 0 : i32
    return %c0_i32, %c0_i32_0 : i32, i32
  }
  func.func @transform_10(%arg0: i32) -> (i32, i32) {
    %c0_i32 = arith.constant 0 : i32
    %c0_i32_0 = arith.constant 0 : i32
    %c0_i32_1 = arith.constant 0 : i32
    return %c0_i32, %c0_i32_0 : i32, i32
  }
  func.func @transform_11(%arg0: i32) -> (i32, i32) {
    %c0_i32 = arith.constant 0 : i32
    %c0_i32_0 = arith.constant 0 : i32
    return %arg0, %c0_i32 : i32, i32
  }
}

</mosaic_0001>

<llo_original>
// kernel: block_forward.1
$region0: #{block_forward.1}
  #allocation0 [shape = 'u32[]', space=smem, size = 0x4, offset = 0x4, fixed_abs, tag = 'smem constant byte address 0x4 - core index']
  #allocation1 [shape = 'u32[144,128]{1,0:T(1,128)}', space=vmem, size = 0x12000, scoped, tag = 'internal scratch']
  %s0 = inlined_call_operand.hbm [shape: f32[16,112], index: 0, kind: input, shape index: {}]
  %s1 = inlined_call_operand.vmem [shape: f32[1,112], index: 1, kind: input, shape index: {}]
  %s2 = inlined_call_operand.vmem [shape: f32[1,112], index: 2, kind: input, shape index: {}]
  %s3 = inlined_call_operand.hbm [shape: bf16[112,112], index: 3, kind: input, shape index: {}]
  %s4 = inlined_call_operand.vmem [shape: f32[1,112], index: 4, kind: input, shape index: {}]
  %s5 = inlined_call_operand.vmem [shape: f32[1,112], index: 5, kind: input, shape index: {}]
  %s6 = inlined_call_operand.vmem [shape: f32[1,112], index: 6, kind: input, shape index: {}]
  %s7 = inlined_call_operand.hbm [shape: bf16[112,448], index: 7, kind: input, shape index: {}]
  %s8 = inlined_call_operand.vmem [shape: f32[1,448], index: 8, kind: input, shape index: {}]
  %s9 = inlined_call_operand.hbm [shape: bf16[448,112], index: 9, kind: input, shape index: {}]
  %s10 = inlined_call_operand.vmem [shape: f32[1,112], index: 10, kind: input, shape index: {}]
  %s11 = inlined_call_operand.hbm [shape: f32[16,112], index: 11, kind: output, shape index: {}]
  %s12 = sld [smem:[#allocation0]]
  $region93: #{block_forward.1} parent=0
    _
  %s14 = ssub.s32 1, %s12
  %s15 = scalar_select 0, %s14, %s12
  $region1: #{block_forward.1} parent=0
    #allocation2 [shape = 'u8[8192]{0}', space=vmem, size = 0x2000, scoped, tag = 'input window, operand 0']
    #allocation3 [shape = 's32[2]{0}', space=sflag, size = 0x8, scoped, tag = 'scoped memory for block_forward.1']
    #allocation4 [shape = 's32[2]{0}', space=sflag, size = 0x8, scoped, tag = 'scoped memory for block_forward.1']
    #allocation5 [shape = 'u8[28672]{0}', space=vmem, size = 0x7000, scoped, tag = 'input window, operand 3, single buffered']
    #allocation6 [shape = 's32[1]{0}', space=sflag, size = 0x4, scoped, tag = 'scoped memory for block_forward.1']
    #allocation7 [shape = 'u8[114688]{0}', space=vmem, size = 0x1c000, scoped, tag = 'input window, operand 7, single buffered']
    #allocation8 [shape = 'u8[114688]{0}', space=vmem, size = 0x1c000, scoped, tag = 'input window, operand 9, single buffered']
    #allocation9 [shape = 's32[1]{0}', space=sflag, size = 0x4, scoped, tag = 'scoped memory for block_forward.1']
    #allocation10 [shape = 'u8[8192]{0}', space=vmem, size = 0x2000, scoped, tag = 'output window, operand 0']
    %16 = vsyncpa [#allocation3], 0
    %s17 = scalar_lea.sflag [#allocation3], 1
    %18 = vsyncpa %s17, 0
    %19 = vsyncpa [#allocation6], 0
    %20 = vsyncpa [#allocation9], 0
    %21 = vsyncpa [#allocation4], 0
    %s22 = scalar_lea.sflag [#allocation4], 1
    %23 = vsyncpa %s22, 0
    loop: start=0, step=1, limit=4
    $region2: #{block_forward.1} parent=1 // loop_pre_header
      _
    $region3: #{block_forward.1} parent=1 // loop_header
      %s25 = sphi 0, %s29
      %p26 = scmp.ge.s32.totalorder %s25, 4
      %s35 = sphi 0, %s37
      %s38 = sphi 0, %s35
      %s39 = sphi 0, %s38
      %s55 = sphi 0, %s39
      %s59 = sphi 0, %s59
      %s61 = sphi 0, %s59
      %s62 = sphi 0, %s61
      %s76 = sphi 0, %s62
      %s80 = sphi 0, %s80
      %s82 = sphi 0, %s80
      %s83 = sphi 0, %s82
      %s97 = sphi 0, %s83
      %s101 = sphi 0, %s101
      %s103 = sphi 0, %s101
      %s104 = sphi 0, %s103
      %s118 = sphi 0, %s104
      %s122 = sphi 0, %s122
      %s124 = sphi 0, %s122
      %s125 = sphi 0, %s124
      %s139 = sphi 0, %s125
      %s143 = sphi 0, %s143
      %s145 = sphi 0, %s143
      %s146 = sphi 0, %s145
      %s160 = sphi 0, %s146
      %s164 = sphi 0, %s164
      %s166 = sphi 0, %s164
      %s167 = sphi 0, %s166
      %s181 = sphi 0, %s167
      %s185 = sphi 0, %s185
      %s187 = sphi 0, %s185
      %s188 = sphi 0, %s187
      %s202 = sphi 0, %s188
      %s206 = sphi 0, %s206
      %s208 = sphi 0, %s206
      %s209 = sphi 0, %s208
      %s223 = sphi 0, %s209
      %s227 = sphi 0, %s227
      %s229 = sphi 0, %s227
      %s230 = sphi 0, %s229
      %s244 = sphi 0, %s230
      %s248 = sphi 0, %s248
      %s250 = sphi 0, %s248
      %s251 = sphi 0, %s250
      %s265 = sphi 0, %s251
      %s271 = sphi 0, %s273
      %s274 = sphi 0, %s271
      %s275 = sphi 0, %s274
      %s291 = sphi 0, %s275
    $region4: #{block_forward.1} parent=1 // loop_header_branch
      %28 = sbr.rel (%p26) target = $region8
    $region5: #{block_forward.1} parent=1 // loop_body
      %s30 = ssub.s32 %s25, 1
      %s31 = ssub.s32 %s25, 2
      %s32 = sadd.s32 %s25, 1
      %s33 = ssub.s32 %s25, %s32
      %p34 = scmp.eq.s32.totalorder %s33, 0
      %s36 = sadd.s32 %s35, 1
      %s37 = scalar_select %p34, %s35, %s36
      %p40 = pneg %p34
      %p41 = scmp.eq.s32.totalorder %s25, 1
      %p42 = por %p40, %p41
      %p43 = scmp.ne.s32.totalorder %s35, %s38
      %p44 = scmp.eq.s32.totalorder %s25, 0
      %p45 = por %p43, %p44
      %p46 = scmp.ne.s32.totalorder %s35, %s38
      %p47 = scmp.eq.s32.totalorder %s30, 1
      %p48 = por %p46, %p47
      %p49 = scmp.ne.s32.totalorder %s38, %s39
      %p50 = scmp.eq.s32.totalorder %s30, 0
      %p51 = por %p49, %p50
      %p52 = scmp.ne.s32.totalorder %s38, %s39
      %p53 = scmp.eq.s32.totalorder %s31, 1
      %p54 = por %p52, %p53
      %p56 = scmp.ne.s32.totalorder %s39, %s55
      %p57 = scmp.eq.s32.totalorder %s31, 0
      %p58 = por %p56, %p57
      %s60 = sadd.s32 %s59, 1
      %p63 = scmp.eq.s32.totalorder %s25, 1
      %p64 = scmp.ne.s32.totalorder %s59, %s61
      %p65 = scmp.eq.s32.totalorder %s25, 0
      %p66 = por %p64, %p65
      %p67 = scmp.ne.s32.totalorder %s59, %s61
      %p68 = scmp.eq.s32.totalorder %s30, 1
      %p69 = por %p67, %p68
      %p70 = scmp.ne.s32.totalorder %s61, %s62
      %p71 = scmp.eq.s32.totalorder %s30, 0
      %p72 = por %p70, %p71
      %p73 = scmp.ne.s32.totalorder %s61, %s62
      %p74 = scmp.eq.s32.totalorder %s31, 1
      %p75 = por %p73, %p74
      %p77 = scmp.ne.s32.totalorder %s62, %s76
      %p78 = scmp.eq.s32.totalorder %s31, 0
      %p79 = por %p77, %p78
      %s81 = sadd.s32 %s80, 1
      %p84 = scmp.eq.s32.totalorder %s25, 1
      %p85 = scmp.ne.s32.totalorder %s80, %s82
      %p86 = scmp.eq.s32.totalorder %s25, 0
      %p87 = por %p85, %p86
      %p88 = scmp.ne.s32.totalorder %s80, %s82
      %p89 = scmp.eq.s32.totalorder %s30, 1
      %p90 = por %p88, %p89
      %p91 = scmp.ne.s32.totalorder %s82, %s83
      %p92 = scmp.eq.s32.totalorder %s30, 0
      %p93 = por %p91, %p92
      %p94 = scmp.ne.s32.totalorder %s82, %s83
      %p95 = scmp.eq.s32.totalorder %s31, 1
      %p96 = por %p94, %p95
      %p98 = scmp.ne.s32.totalorder %s83, %s97
      %p99 = scmp.eq.s32.totalorder %s31, 0
      %p100 = por %p98, %p99
      %s102 = sadd.s32 %s101, 1
      %p105 = scmp.eq.s32.totalorder %s25, 1
      %p106 = scmp.ne.s32.totalorder %s101, %s103
      %p107 = scmp.eq.s32.totalorder %s25, 0
      %p108 = por %p106, %p107
      %p109 = scmp.ne.s32.totalorder %s101, %s103
      %p110 = scmp.eq.s32.totalorder %s30, 1
      %p111 = por %p109, %p110
      %p112 = scmp.ne.s32.totalorder %s103, %s104
      %p113 = scmp.eq.s32.totalorder %s30, 0
      %p114 = por %p112, %p113
      %p115 = scmp.ne.s32.totalorder %s103, %s104
      %p116 = scmp.eq.s32.totalorder %s31, 1
      %p117 = por %p115, %p116
      %p119 = scmp.ne.s32.totalorder %s104, %s118
      %p120 = scmp.eq.s32.totalorder %s31, 0
      %p121 = por %p119, %p120
      %s123 = sadd.s32 %s122, 1
      %p126 = scmp.eq.s32.totalorder %s25, 1
      %p127 = scmp.ne.s32.totalorder %s122, %s124
      %p128 = scmp.eq.s32.totalorder %s25, 0
      %p129 = por %p127, %p128
      %p130 = scmp.ne.s32.totalorder %s122, %s124
      %p131 = scmp.eq.s32.totalorder %s30, 1
      %p132 = por %p130, %p131
      %p133 = scmp.ne.s32.totalorder %s124, %s125
      %p134 = scmp.eq.s32.totalorder %s30, 0
      %p135 = por %p133, %p134
      %p136 = scmp.ne.s32.totalorder %s124, %s125
      %p137 = scmp.eq.s32.totalorder %s31, 1
      %p138 = por %p136, %p137
      %p140 = scmp.ne.s32.totalorder %s125, %s139
      %p141 = scmp.eq.s32.totalorder %s31, 0
      %p142 = por %p140, %p141
      %s144 = sadd.s32 %s143, 1
      %p147 = scmp.eq.s32.totalorder %s25, 1
      %p148 = scmp.ne.s32.totalorder %s143, %s145
      %p149 = scmp.eq.s32.totalorder %s25, 0
      %p150 = por %p148, %p149
      %p151 = scmp.ne.s32.totalorder %s143, %s145
      %p152 = scmp.eq.s32.totalorder %s30, 1
      %p153 = por %p151, %p152
      %p154 = scmp.ne.s32.totalorder %s145, %s146
      %p155 = scmp.eq.s32.totalorder %s30, 0
      %p156 = por %p154, %p155
      %p157 = scmp.ne.s32.totalorder %s145, %s146
      %p158 = scmp.eq.s32.totalorder %s31, 1
      %p159 = por %p157, %p158
      %p161 = scmp.ne.s32.totalorder %s146, %s160
      %p162 = scmp.eq.s32.totalorder %s31, 0
      %p163 = por %p161, %p162
      %s165 = sadd.s32 %s164, 1
      %p168 = scmp.eq.s32.totalorder %s25, 1
      %p169 = scmp.ne.s32.totalorder %s164, %s166
      %p170 = scmp.eq.s32.totalorder %s25, 0
      %p171 = por %p169, %p170
      %p172 = scmp.ne.s32.totalorder %s164, %s166
      %p173 = scmp.eq.s32.totalorder %s30, 1
      %p174 = por %p172, %p173
      %p175 = scmp.ne.s32.totalorder %s166, %s167
      %p176 = scmp.eq.s32.totalorder %s30, 0
      %p177 = por %p175, %p176
      %p178 = scmp.ne.s32.totalorder %s166, %s167
      %p179 = scmp.eq.s32.totalorder %s31, 1
      %p180 = por %p178, %p179
      %p182 = scmp.ne.s32.totalorder %s167, %s181
      %p183 = scmp.eq.s32.totalorder %s31, 0
      %p184 = por %p182, %p183
      %s186 = sadd.s32 %s185, 1
      %p189 = scmp.eq.s32.totalorder %s25, 1
      %p190 = scmp.ne.s32.totalorder %s185, %s187
      %p191 = scmp.eq.s32.totalorder %s25, 0
      %p192 = por %p190, %p191
      %p193 = scmp.ne.s32.totalorder %s185, %s187
      %p194 = scmp.eq.s32.totalorder %s30, 1
      %p195 = por %p193, %p194
      %p196 = scmp.ne.s32.totalorder %s187, %s188
      %p197 = scmp.eq.s32.totalorder %s30, 0
      %p198 = por %p196, %p197
      %p199 = scmp.ne.s32.totalorder %s187, %s188
      %p200 = scmp.eq.s32.totalorder %s31, 1
      %p201 = por %p199, %p200
      %p203 = scmp.ne.s32.totalorder %s188, %s202
      %p204 = scmp.eq.s32.totalorder %s31, 0
      %p205 = por %p203, %p204
      %s207 = sadd.s32 %s206, 1
      %p210 = scmp.eq.s32.totalorder %s25, 1
      %p211 = scmp.ne.s32.totalorder %s206, %s208
      %p212 = scmp.eq.s32.totalorder %s25, 0
      %p213 = por %p211, %p212
      %p214 = scmp.ne.s32.totalorder %s206, %s208
      %p215 = scmp.eq.s32.totalorder %s30, 1
      %p216 = por %p214, %p215
      %p217 = scmp.ne.s32.totalorder %s208, %s209
      %p218 = scmp.eq.s32.totalorder %s30, 0
      %p219 = por %p217, %p218
      %p220 = scmp.ne.s32.totalorder %s208, %s209
      %p221 = scmp.eq.s32.totalorder %s31, 1
      %p222 = por %p220, %p221
      %p224 = scmp.ne.s32.totalorder %s209, %s223
      %p225 = scmp.eq.s32.totalorder %s31, 0
      %p226 = por %p224, %p225
      %s228 = sadd.s32 %s227, 1
      %p231 = scmp.eq.s32.totalorder %s25, 1
      %p232 = scmp.ne.s32.totalorder %s227, %s229
      %p233 = scmp.eq.s32.totalorder %s25, 0
      %p234 = por %p232, %p233
      %p235 = scmp.ne.s32.totalorder %s227, %s229
      %p236 = scmp.eq.s32.totalorder %s30, 1
      %p237 = por %p235, %p236
      %p238 = scmp.ne.s32.totalorder %s229, %s230
      %p239 = scmp.eq.s32.totalorder %s30, 0
      %p240 = por %p238, %p239
      %p241 = scmp.ne.s32.totalorder %s229, %s230
      %p242 = scmp.eq.s32.totalorder %s31, 1
      %p243 = por %p241, %p242
      %p245 = scmp.ne.s32.totalorder %s230, %s244
      %p246 = scmp.eq.s32.totalorder %s31, 0
      %p247 = por %p245, %p246
      %s249 = sadd.s32 %s248, 1
      %p252 = scmp.eq.s32.totalorder %s25, 1
      %p253 = scmp.ne.s32.totalorder %s248, %s250
      %p254 = scmp.eq.s32.totalorder %s25, 0
      %p255 = por %p253, %p254
      %p256 = scmp.ne.s32.totalorder %s248, %s250
      %p257 = scmp.eq.s32.totalorder %s30, 1
      %p258 = por %p256, %p257
      %p259 = scmp.ne.s32.totalorder %s250, %s251
      %p260 = scmp.eq.s32.totalorder %s30, 0
      %p261 = por %p259, %p260
      %p262 = scmp.ne.s32.totalorder %s250, %s251
      %p263 = scmp.eq.s32.totalorder %s31, 1
      %p264 = por %p262, %p263
      %p266 = scmp.ne.s32.totalorder %s251, %s265
      %p267 = scmp.eq.s32.totalorder %s31, 0
      %p268 = por %p266, %p267
      %s269 = ssub.s32 %s25, %s32
      %p270 = scmp.eq.s32.totalorder %s269, 0
      %s272 = sadd.s32 %s271, 1
      %s273 = scalar_select %p270, %s271, %s272
      %p276 = pneg %p270
      %p277 = scmp.eq.s32.totalorder %s25, 1
      %p278 = por %p276, %p277
      %p279 = scmp.ne.s32.totalorder %s271, %s274
      %p280 = scmp.eq.s32.totalorder %s25, 0
      %p281 = por %p279, %p280
      %p282 = scmp.ne.s32.totalorder %s271, %s274
      %p283 = scmp.eq.s32.totalorder %s30, 1
      %p284 = por %p282, %p283
      %p285 = scmp.ne.s32.totalorder %s274, %s275
      %p286 = scmp.eq.s32.totalorder %s30, 0
      %p287 = por %p285, %p286
      %p288 = scmp.ne.s32.totalorder %s274, %s275
      %p289 = scmp.eq.s32.totalorder %s31, 1
      %p290 = por %p288, %p289
      %p292 = scmp.ne.s32.totalorder %s275, %s291
      %p293 = scmp.eq.s32.totalorder %s31, 0
      %p294 = por %p292, %p293
      %p295 = scmp.le.s32.totalorder 1, %s25
      %p296 = scmp.lt.s32.totalorder %s25, 3
      %p297 = pnand %p295, %p296
      %p298 = pneg %p297
      // Predicated region
      $region9: #{block_forward.1} parent=5 // pred_check
        _
      $region10: #{block_forward.1} parent=5 // pred_check_branch
        %300 = sbr.rel (%p297) target = $region12
      $region11: #{block_forward.1} parent=5 // pred_region
        %s301 = ssub.s32 %s25, 1
        // Predicated region
        $region13: #{block_forward.1} parent=11 // pred_check
          %p302 = pneg %p72
        $region14: #{block_forward.1} parent=11 // pred_check_branch
          %304 = sbr.rel (%p302) target = $region16
        $region15: #{block_forward.1} parent=11 // pred_region
          _
        $region16: #{block_forward.1} parent=11 // pred_fallthru
          _
        // Predicated region
        $region17: #{block_forward.1} parent=11 // pred_check
          %p305 = pneg %p93
        $region18: #{block_forward.1} parent=11 // pred_check_branch
          %307 = sbr.rel (%p305) target = $region20
        $region19: #{block_forward.1} parent=11 // pred_region
          _
        $region20: #{block_forward.1} parent=11 // pred_fallthru
          _
        // Predicated region
        $region21: #{block_forward.1} parent=11 // pred_check
          %p308 = pneg %p114
        $region22: #{block_forward.1} parent=11 // pred_check_branch
          %310 = sbr.rel (%p308) target = $region24
        $region23: #{block_forward.1} parent=11 // pred_region
          %s312 = ssub.s32 896, 896
          %313 = vsyncadd [#allocation6], %s312
          %s314 = sshll.u32 [#allocation5], 4
          %s315 = int_to_ptr.vmem [resolvable:$true] %s314
          %320 = dma.hbm_to_vmem [thread:$0]  %s3, 896, %s315, [#allocation6], 64, 64, 4
        $region24: #{block_forward.1} parent=11 // pred_fallthru
          _
        // Predicated region
        $region25: #{block_forward.1} parent=11 // pred_check
          %p321 = pneg %p135
        $region26: #{block_forward.1} parent=11 // pred_check_branch
          %323 = sbr.rel (%p321) target = $region28
        $region27: #{block_forward.1} parent=11 // pred_region
          _
        $region28: #{block_forward.1} parent=11 // pred_fallthru
          _
        // Predicated region
        $region29: #{block_forward.1} parent=11 // pred_check
          %p324 = pneg %p156
        $region30: #{block_forward.1} parent=11 // pred_check_branch
          %326 = sbr.rel (%p324) target = $region32
        $region31: #{block_forward.1} parent=11 // pred_region
          _
        $region32: #{block_forward.1} parent=11 // pred_fallthru
          _
        // Predicated region
        $region33: #{block_forward.1} parent=11 // pred_check
          %p327 = pneg %p177
        $region34: #{block_forward.1} parent=11 // pred_check_branch
          %329 = sbr.rel (%p327) target = $region36
        $region35: #{block_forward.1} parent=11 // pred_region
          _
        $region36: #{block_forward.1} parent=11 // pred_fallthru
          _
        // Predicated region
        $region37: #{block_forward.1} parent=11 // pred_check
          %p330 = pneg %p198
        $region38: #{block_forward.1} parent=11 // pred_check_branch
          %332 = sbr.rel (%p330) target = $region40
        $region39: #{block_forward.1} parent=11 // pred_region
          %s334 = ssub.s32 3584, 3584
          %335 = vsyncadd [#allocation6], %s334
          %s336 = sshll.u32 [#allocation7], 4
          %s337 = int_to_ptr.vmem [resolvable:$true] %s336
          %342 = dma.hbm_to_vmem [thread:$0]  %s7, 3584, %s337, [#allocation6], 256, 256, 16
        $region40: #{block_forward.1} parent=11 // pred_fallthru
          _
        // Predicated region
        $region41: #{block_forward.1} parent=11 // pred_check
          %p343 = pneg %p219
        $region42: #{block_forward.1} parent=11 // pred_check_branch
          %345 = sbr.rel (%p343) target = $region44
        $region43: #{block_forward.1} parent=11 // pred_region
          _
        $region44: #{block_forward.1} parent=11 // pred_fallthru
          _
        // Predicated region
        $region45: #{block_forward.1} parent=11 // pred_check
          %p346 = pneg %p240
        $region46: #{block_forward.1} parent=11 // pred_check_branch
          %348 = sbr.rel (%p346) target = $region48
        $region47: #{block_forward.1} parent=11 // pred_region
          %s350 = ssub.s32 3584, 3584
          %351 = vsyncadd [#allocation9], %s350
          %s352 = sshll.u32 [#allocation8], 4
          %s353 = int_to_ptr.vmem [resolvable:$true] %s352
          %358 = dma.hbm_to_vmem [thread:$0]  %s9, 3584, %s353, [#allocation9], 64, 64, 4
        $region48: #{block_forward.1} parent=11 // pred_fallthru
          _
        // Predicated region
        $region49: #{block_forward.1} parent=11 // pred_check
          %p359 = pneg %p261
        $region50: #{block_forward.1} parent=11 // pred_check_branch
          %361 = sbr.rel (%p359) target = $region52
        $region51: #{block_forward.1} parent=11 // pred_region
          _
        $region52: #{block_forward.1} parent=11 // pred_fallthru
          _
      $region12: #{block_forward.1} parent=5 // pred_fallthru
        _
      %p362 = scmp.lt.s32.totalorder %s25, 2
      // Predicated region
      $region53: #{block_forward.1} parent=5 // pred_check
        %p363 = pneg %p362
      $region54: #{block_forward.1} parent=5 // pred_check_branch
        %365 = sbr.rel (%p363) target = $region56
      $region55: #{block_forward.1} parent=5 // pred_region
        // Predicated region
        $region57: #{block_forward.1} parent=55 // pred_check
          %p366 = pneg %p45
        $region58: #{block_forward.1} parent=55 // pred_check_branch
          %368 = sbr.rel (%p366) target = $region60
        $region59: #{block_forward.1} parent=55 // pred_region
          %s369 = sand.u32 %s35, 1
          %s370 = scalar_lea.sflag [#allocation3], %s369
          %s371 = sand.u32 %s35, 1
          %s372 = smul.addr %s371, 8
          %s373 = scalar_lea.vmem [#allocation2], %s372
          %s375 = ssub.s32 128, 128
          %376 = vsyncadd %s370, %s375
          %s377 = smul.addr %s25, 128
          %s378 = scalar_lea.hbm %s0, %s377
          %s380 = sshll.u32 %s373, 4
          %s381 = int_to_ptr.vmem [resolvable:$true] %s380
          %383 = dma.hbm_to_vmem [thread:$0]  %s378, 128, %s381, %s370
        $region60: #{block_forward.1} parent=55 // pred_fallthru
          _
      $region56: #{block_forward.1} parent=5 // pred_fallthru
        _
      %p384 = scmp.le.s32.totalorder 1, %s25
      %p385 = scmp.lt.s32.totalorder %s25, 3
      %p386 = pnand %p384, %p385
      %p387 = pneg %p386
      // Predicated region
      $region61: #{block_forward.1} parent=5 // pred_check
        _
      $region62: #{block_forward.1} parent=5 // pred_check_branch
        %389 = sbr.rel (%p386) target = $region64
      $region63: #{block_forward.1} parent=5 // pred_region
        %s390 = ssub.s32 %s25, 1
        %s391 = sand.u32 %s38, 1
        %s392 = scalar_lea.sflag [#allocation3], %s391
        %s393 = sand.u32 %s38, 1
        %s394 = smul.addr %s393, 8
        %s395 = scalar_lea.vmem [#allocation2], %s394
        // Predicated region
        $region65: #{block_forward.1} parent=63 // pred_check
          %p396 = pneg %p51
        $region66: #{block_forward.1} parent=63 // pred_check_branch
          %398 = sbr.rel (%p396) target = $region68
        $region67: #{block_forward.1} parent=63 // pred_region
          %399 = dma.done %s392, 128
        $region68: #{block_forward.1} parent=63 // pred_fallthru
          _
        // Predicated region
        $region69: #{block_forward.1} parent=63 // pred_check
          %p400 = pneg %p114
        $region70: #{block_forward.1} parent=63 // pred_check_branch
          %402 = sbr.rel (%p400) target = $region72
        $region71: #{block_forward.1} parent=63 // pred_region
          %403 = dma.done [#allocation6], 896
        $region72: #{block_forward.1} parent=63 // pred_fallthru
          _
        // Predicated region
        $region73: #{block_forward.1} parent=63 // pred_check
          %p404 = pneg %p198
        $region74: #{block_forward.1} parent=63 // pred_check_branch
          %406 = sbr.rel (%p404) target = $region76
        $region75: #{block_forward.1} parent=63 // pred_region
          %407 = dma.done [#allocation6], 3584
        $region76: #{block_forward.1} parent=63 // pred_fallthru
          _
        // Predicated region
        $region77: #{block_forward.1} parent=63 // pred_check
          %p408 = pneg %p240
        $region78: #{block_forward.1} parent=63 // pred_check_branch
          %410 = sbr.rel (%p408) target = $region80
        $region79: #{block_forward.1} parent=63 // pred_region
          %411 = dma.done [#allocation9], 3584
        $region80: #{block_forward.1} parent=63 // pred_fallthru
          _
        %s412 = sand.u32 %s38, 1
        %s413 = scalar_lea.sflag [#allocation3], %s412
        %s414 = sand.u32 %s38, 1
        %s415 = smul.addr %s414, 8
        %s416 = scalar_lea.vmem [#allocation2], %s415
        %p417 = pneg %p51
        %p418 = pneg %p48
        %p419 = pneg %p72
        %p420 = pneg %p69
        %p421 = pneg %p93
        %p422 = pneg %p90
        %p423 = pneg %p114
        %p424 = pneg %p111
        %p425 = pneg %p135
        %p426 = pneg %p132
        %p427 = pneg %p156
        %p428 = pneg %p153
        %p429 = pneg %p177
        %p430 = pneg %p174
        %p431 = pneg %p198
        %p432 = pneg %p195
        %p433 = pneg %p219
        %p434 = pneg %p216
        %p435 = pneg %p240
        %p436 = pneg %p237
        %p437 = pneg %p261
        %p438 = pneg %p258
        %p439 = pneg %p287
        %p440 = pneg %p284
        %s441 = sand.u32 %s274, 1
        %s442 = scalar_lea.sflag [#allocation4], %s441
        %s443 = sand.u32 %s274, 1
        %s444 = smul.addr %s443, 8
        %s445 = scalar_lea.vmem [#allocation10], %s444
        %v447 = vld [vmem:[%s395] sm:$0xff]
        %vm448 = vcmask 916480
        %v449 = vsel %vm448, %v447, 0.0
        %450 = vadd.xlane.f32.xlu0 %v449
        %v451 = vpop.xlane.xlu0 %450
        %v452 = vmul.f32 %v451, 0.008928572
        %v453 = vsub.f32 %v447, %v452
        %v454 = vmul.f32 %v453, %v453
        %v455 = vsel %vm448, %v454, 0.0
        %456 = vadd.xlane.f32.xlu0 %v455
        %v457 = vpop.xlane.xlu0 %456
        %v458 = vmul.f32 %v457, 0.008928572
        %v459 = vadd.f32 %v458, 1e-05
        %v460 = vrsqrt.pop %v459
        %v461 = vmul.f32 %v453, %v460
        %v462 = vld [vmem:[%s1] sm:$0x1]
        %v464 = vlaneseq
        %v465 = vshrl.u32 %v464, 7
        %v466 = vsub.s32 0, %v465
        %v467 = vrot.slane %v462, %v466
        %v469 = vmul.f32 %v461, %v467
        %v470 = vld [vmem:[%s2] sm:$0x1]
        %v472 = vlaneseq
        %v473 = vshrl.u32 %v472, 7
        %v474 = vsub.s32 0, %v473
        %v475 = vrot.slane %v470, %v474
        %v477 = vadd.f32 %v469, %v475
        %v478 = vpack.c.bf16 %v477, %v477
        %v479 = vld [vmem:[#allocation5] sm:$0xf]
        %v480 = vld [vmem:[#allocation5 + $0x4] sm:$0xf]
        %v481 = vld [vmem:[#allocation5 + $0x8] sm:$0xf]
        %v482 = vld [vmem:[#allocation5 + $0xc] sm:$0xf]
        %v483 = vld [vmem:[#allocation5 + $0x10] sm:$0xf]
        %v484 = vld [vmem:[#allocation5 + $0x14] sm:$0xf]
        %v485 = vld [vmem:[#allocation5 + $0x18] sm:$0xf]
        %v486 = vld [vmem:[#allocation5 + $0x1c] sm:$0xf]
        %v487 = vld [vmem:[#allocation5 + $0x20] sm:$0xf]
        %v488 = vld [vmem:[#allocation5 + $0x24] sm:$0xf]
        %v489 = vld [vmem:[#allocation5 + $0x28] sm:$0xf]
        %v490 = vld [vmem:[#allocation5 + $0x2c] sm:$0xf]
        %v491 = vld [vmem:[#allocation5 + $0x30] sm:$0xf]
        %v492 = vld [vmem:[#allocation5 + $0x34] sm:$0xf]
        %v493 = vld [vmem:[%s4] sm:$0x1]
        %v495 = vlaneseq
        %v496 = vshrl.u32 %v495, 7
        %v497 = vsub.s32 0, %v496
        %v498 = vrot.slane %v493, %v497
        %v514 = vunpack.c.l.b16 %v479
        %v515 = vunpack.c.l.b16 %v480
        %v516 = vunpack.c.l.b16 %v481
        %v517 = vunpack.c.l.b16 %v482
        %v518 = vunpack.c.l.b16 %v483
        %v519 = vunpack.c.l.b16 %v484
        %v520 = vunpack.c.l.b16 %v485
        %v521 = vunpack.c.l.b16 %v486
        %v522 = vunpack.c.l.b16 %v487
        %v523 = vunpack.c.l.b16 %v488
        %v524 = vunpack.c.l.b16 %v489
        %v525 = vunpack.c.l.b16 %v490
        %v526 = vunpack.c.l.b16 %v491
        %v527 = vunpack.c.l.b16 %v492
        %v528 = vpack.c.b16 %v515, %v514
        %v529 = vpack.c.b16 %v517, %v516
        %v530 = vpack.c.b16 %v519, %v518
        %v531 = vpack.c.b16 %v521, %v520
        %v532 = vpack.c.b16 %v523, %v522
        %v533 = vpack.c.b16 %v525, %v524
        %v534 = vpack.c.b16 %v527, %v526
        %v543 = vsel %vm448, %v478, 0
        %545 = vmatprep.subr.bf16.mxu0 0
        %546 = vmatpush1.bf16.msra.mxu0 %v528
        %547 = vmatprep.subr.bf16.mxu0 0
        %548 = vmatpush1.bf16.msra.mxu0 %v529
        %549 = vmatprep.subr.bf16.mxu0 0
        %550 = vmatpush1.bf16.msra.mxu0 %v530
        %551 = vmatprep.subr.bf16.mxu0 0
        %552 = vmatpush1.bf16.msra.mxu0 %v531
        %553 = vmatprep.subr.bf16.mxu0 0
        %554 = vmatpush1.bf16.msra.mxu0 %v532
        %555 = vmatprep.subr.bf16.mxu0 0
        %556 = vmatpush1.bf16.msra.mxu0 %v533
        %557 = vmatprep.subr.bf16.mxu0 0
        %558 = vmatpush1.bf16.msra.mxu0 %v534
        %559 = vmatprep.subr.bf16.mxu0 0
        %560 = vmatpush1.bf16.msra.mxu0 0
        %561 = vmatprep.subr.bf16.mxu0 0
        %562 = vmatpush1.bf16.msra.mxu0 0
        %563 = vmatprep.subr.bf16.mxu0 0
        %564 = vmatpush1.bf16.msra.mxu0 0
        %565 = vmatprep.subr.bf16.mxu0 0
        %566 = vmatpush1.bf16.msra.mxu0 0
        %567 = vmatprep.subr.bf16.mxu0 0
        %568 = vmatpush1.bf16.msra.mxu0 0
        %569 = vmatprep.subr.bf16.mxu0 0
        %570 = vmatpush1.bf16.msra.mxu0 0
        %571 = vmatprep.subr.bf16.mxu0 0
        %572 = vmatpush1.bf16.msra.mxu0 0
        %573 = vmatprep.subr.bf16.mxu0 0
        %574 = vmatpush1.bf16.msra.mxu0 0
        %575 = vmatprep.subr.bf16.mxu0 0
        %576 = vmatpush1.bf16.msra.mxu0 0
        %577 = vmatprep.mubr.bf16.mxu0 0
        %578 = vmatmul.mubr.bf16.gmra.mrb[0].mxu0 %v543
        %v579 = vpop.f32.mrb[0].mxu0
        %v580 = vadd.f32 %v498, %v579
        %v581 = vpop.f32.mrb[0].mxu0
        %v582 = vpop.f32.mrb[0].mxu0
        %v583 = vpop.f32.mrb[0].mxu0
        %584 = vdwg.mxu0
        %v585 = vadd.f32 %v447, %v580
        %v586 = vsel %vm448, %v585, 0.0
        %587 = vadd.xlane.f32.xlu0 %v586
        %v588 = vpop.xlane.xlu0 %587
        %v589 = vmul.f32 %v588, 0.008928572
        %v590 = vsub.f32 %v585, %v589
        %v591 = vmul.f32 %v590, %v590
        %v592 = vsel %vm448, %v591, 0.0
        %593 = vadd.xlane.f32.xlu0 %v592
        %v594 = vpop.xlane.xlu0 %593
        %v595 = vmul.f32 %v594, 0.008928572
        %v596 = vadd.f32 %v595, 1e-05
        %v597 = vrsqrt.pop %v596
        %v598 = vmul.f32 %v590, %v597
        %v599 = vld [vmem:[%s5] sm:$0x1]
        %v601 = vlaneseq
        %v602 = vshrl.u32 %v601, 7
        %v603 = vsub.s32 0, %v602
        %v604 = vrot.slane %v599, %v603
        %v606 = vmul.f32 %v598, %v604
        %v607 = vld [vmem:[%s6] sm:$0x1]
        %v609 = vlaneseq
        %v610 = vshrl.u32 %v609, 7
        %v611 = vsub.s32 0, %v610
        %v612 = vrot.slane %v607, %v611
        %v614 = vadd.f32 %v606, %v612
        %v615 = vpack.c.bf16 %v614, %v614
        %v616 = vld [vmem:[#allocation7] sm:$0xff]
        %v617 = vld [vmem:[#allocation7 + $0x8] sm:$0xff]
        %v618 = vld [vmem:[#allocation7 + $0x10] sm:$0xff]
        %v619 = vld [vmem:[#allocation7 + $0x18] sm:$0xff]
        %v620 = vld [vmem:[#allocation7 + $0x20] sm:$0xff]
        %v621 = vld [vmem:[#allocation7 + $0x28] sm:$0xff]
        %v622 = vld [vmem:[#allocation7 + $0x30] sm:$0xff]
        %v623 = vld [vmem:[#allocation7 + $0x38] sm:$0xff]
        %v624 = vld [vmem:[#allocation7 + $0x40] sm:$0xff]
        %v625 = vld [vmem:[#allocation7 + $0x48] sm:$0xff]
        %v626 = vld [vmem:[#allocation7 + $0x50] sm:$0xff]
        %v627 = vld [vmem:[#allocation7 + $0x58] sm:$0xff]
        %v628 = vld [vmem:[#allocation7 + $0x60] sm:$0xff]
        %v629 = vld [vmem:[#allocation7 + $0x68] sm:$0xff]
        %v630 = vld [vmem:[#allocation7 + $0x70] sm:$0xff]
        %v631 = vld [vmem:[#allocation7 + $0x78] sm:$0xff]
        %v632 = vld [vmem:[#allocation7 + $0x80] sm:$0xff]
        %v633 = vld [vmem:[#allocation7 + $0x88] sm:$0xff]
        %v634 = vld [vmem:[#allocation7 + $0x90] sm:$0xff]
        %v635 = vld [vmem:[#allocation7 + $0x98] sm:$0xff]
        %v636 = vld [vmem:[#allocation7 + $0xa0] sm:$0xff]
        %v637 = vld [vmem:[#allocation7 + $0xa8] sm:$0xff]
        %v638 = vld [vmem:[#allocation7 + $0xb0] sm:$0xff]
        %v639 = vld [vmem:[#allocation7 + $0xb8] sm:$0xff]
        %v640 = vld [vmem:[#allocation7 + $0xc0] sm:$0xff]
        %v641 = vld [vmem:[#allocation7 + $0xc8] sm:$0xff]
        %v642 = vld [vmem:[#allocation7 + $0xd0] sm:$0xff]
        %v643 = vld [vmem:[#allocation7 + $0xd8] sm:$0xff]
        %v644 = vld [vmem:[%s8] sm:$0xf]
        %v646 = vlaneseq
        %v647 = vshrl.u32 %v646, 7
        %v648 = vsub.s32 0, %v647
        %v649 = vrot.slane %v644, %v648
        %v650 = vlaneseq
        %v651 = vshrl.u32 %v650, 7
        %v652 = vsub.s32 1, %v651
        %v653 = vrot.slane %v644, %v652
        %v654 = vlaneseq
        %v655 = vshrl.u32 %v654, 7
        %v656 = vsub.s32 2, %v655
        %v657 = vrot.slane %v644, %v656
        %v658 = vlaneseq
        %v659 = vshrl.u32 %v658, 7
        %v660 = vsub.s32 3, %v659
        %v661 = vrot.slane %v644, %v660
        %v694 = vunpack.c.l.b16 %v616
        %v695 = vunpack.c.h.b16 %v616
        %v696 = vunpack.c.l.b16 %v617
        %v697 = vunpack.c.h.b16 %v617
        %v698 = vunpack.c.l.b16 %v618
        %v699 = vunpack.c.h.b16 %v618
        %v700 = vunpack.c.l.b16 %v619
        %v701 = vunpack.c.h.b16 %v619
        %v702 = vunpack.c.l.b16 %v620
        %v703 = vunpack.c.h.b16 %v620
        %v704 = vunpack.c.l.b16 %v621
        %v705 = vunpack.c.h.b16 %v621
        %v706 = vunpack.c.l.b16 %v622
        %v707 = vunpack.c.h.b16 %v622
        %v708 = vunpack.c.l.b16 %v623
        %v709 = vunpack.c.h.b16 %v623
        %v710 = vunpack.c.l.b16 %v624
        %v711 = vunpack.c.h.b16 %v624
        %v712 = vunpack.c.l.b16 %v625
        %v713 = vunpack.c.h.b16 %v625
        %v714 = vunpack.c.l.b16 %v626
        %v715 = vunpack.c.h.b16 %v626
        %v716 = vunpack.c.l.b16 %v627
        %v717 = vunpack.c.h.b16 %v627
        %v718 = vunpack.c.l.b16 %v628
        %v719 = vunpack.c.h.b16 %v628
        %v720 = vunpack.c.l.b16 %v629
        %v721 = vunpack.c.h.b16 %v629
        %v722 = vunpack.c.l.b16 %v630
        %v723 = vunpack.c.h.b16 %v630
        %v724 = vunpack.c.l.b16 %v631
        %v725 = vunpack.c.h.b16 %v631
        %v726 = vunpack.c.l.b16 %v632
        %v727 = vunpack.c.h.b16 %v632
        %v728 = vunpack.c.l.b16 %v633
        %v729 = vunpack.c.h.b16 %v633
        %v730 = vunpack.c.l.b16 %v634
        %v731 = vunpack.c.h.b16 %v634
        %v732 = vunpack.c.l.b16 %v635
        %v733 = vunpack.c.h.b16 %v635
        %v734 = vunpack.c.l.b16 %v636
        %v735 = vunpack.c.h.b16 %v636
        %v736 = vunpack.c.l.b16 %v637
        %v737 = vunpack.c.h.b16 %v637
        %v738 = vunpack.c.l.b16 %v638
        %v739 = vunpack.c.h.b16 %v638
        %v740 = vunpack.c.l.b16 %v639
        %v741 = vunpack.c.h.b16 %v639
        %v742 = vunpack.c.l.b16 %v640
        %v743 = vunpack.c.h.b16 %v640
        %v744 = vunpack.c.l.b16 %v641
        %v745 = vunpack.c.h.b16 %v641
        %v746 = vunpack.c.l.b16 %v642
        %v747 = vunpack.c.h.b16 %v642
        %v748 = vunpack.c.l.b16 %v643
        %v749 = vunpack.c.h.b16 %v643
        %v750 = vpack.c.b16 %v698, %v694
        %v751 = vpack.c.b16 %v699, %v695
        %v752 = vpack.c.b16 %v700, %v696
        %v753 = vpack.c.b16 %v701, %v697
        %v754 = vpack.c.b16 %v706, %v702
        %v755 = vpack.c.b16 %v707, %v703
        %v756 = vpack.c.b16 %v708, %v704
        %v757 = vpack.c.b16 %v709, %v705
        %v758 = vpack.c.b16 %v714, %v710
        %v759 = vpack.c.b16 %v715, %v711
        %v760 = vpack.c.b16 %v716, %v712
        %v761 = vpack.c.b16 %v717, %v713
        %v762 = vpack.c.b16 %v722, %v718
        %v763 = vpack.c.b16 %v723, %v719
        %v764 = vpack.c.b16 %v724, %v720
        %v765 = vpack.c.b16 %v725, %v721
        %v766 = vpack.c.b16 %v730, %v726
        %v767 = vpack.c.b16 %v731, %v727
        %v768 = vpack.c.b16 %v732, %v728
        %v769 = vpack.c.b16 %v733, %v729
        %v770 = vpack.c.b16 %v738, %v734
        %v771 = vpack.c.b16 %v739, %v735
        %v772 = vpack.c.b16 %v740, %v736
        %v773 = vpack.c.b16 %v741, %v737
        %v774 = vpack.c.b16 %v746, %v742
        %v775 = vpack.c.b16 %v747, %v743
        %v776 = vpack.c.b16 %v748, %v744
        %v777 = vpack.c.b16 %v749, %v745
        %v807 = vsel %vm448, %v615, 0
        %809 = vmatprep.subr.bf16.mxu0 %v751
        %810 = vmatpush1.bf16.msra.mxu0 %v750
        %811 = vmatprep.subr.bf16.mxu0 %v755
        %812 = vmatpush1.bf16.msra.mxu0 %v754
        %813 = vmatprep.subr.bf16.mxu0 %v759
        %814 = vmatpush1.bf16.msra.mxu0 %v758
        %815 = vmatprep.subr.bf16.mxu0 %v763
        %816 = vmatpush1.bf16.msra.mxu0 %v762
        %817 = vmatprep.subr.bf16.mxu0 %v767
        %818 = vmatpush1.bf16.msra.mxu0 %v766
        %819 = vmatprep.subr.bf16.mxu0 %v771
        %820 = vmatpush1.bf16.msra.mxu0 %v770
        %821 = vmatprep.subr.bf16.mxu0 %v775
        %822 = vmatpush1.bf16.msra.mxu0 %v774
        %823 = vmatprep.subr.bf16.mxu0 0
        %824 = vmatpush1.bf16.msra.mxu0 0
        %825 = vmatprep.subr.bf16.mxu0 0
        %826 = vmatpush1.bf16.msra.mxu0 0
        %827 = vmatprep.subr.bf16.mxu0 0
        %828 = vmatpush1.bf16.msra.mxu0 0
        %829 = vmatprep.subr.bf16.mxu0 0
        %830 = vmatpush1.bf16.msra.mxu0 0
        %831 = vmatprep.subr.bf16.mxu0 0
        %832 = vmatpush1.bf16.msra.mxu0 0
        %833 = vmatprep.subr.bf16.mxu0 0
        %834 = vmatpush1.bf16.msra.mxu0 0
        %835 = vmatprep.subr.bf16.mxu0 0
        %836 = vmatpush1.bf16.msra.mxu0 0
        %837 = vmatprep.subr.bf16.mxu0 0
        %838 = vmatpush1.bf16.msra.mxu0 0
        %839 = vmatprep.subr.bf16.mxu0 0
        %840 = vmatpush1.bf16.msra.mxu0 0
        %841 = vmatprep.mubr.bf16.mxu0 0
        %842 = vmatmul.mubr.bf16.gmra.mrb[0].mxu0 %v807
        %v843 = vpop.f32.mrb[0].mxu0
        %v844 = vadd.f32 %v649, %v843
        %v845 = vpop.f32.mrb[0].mxu0
        %v846 = vadd.f32 %v653, %v845
        %v847 = vpop.f32.mrb[0].mxu0
        %v848 = vpop.f32.mrb[0].mxu0
        %849 = vdwg.mxu0
        %850 = vmatprep.subr.bf16.mxu0 %v753
        %851 = vmatpush1.bf16.msra.mxu0 %v752
        %852 = vmatprep.subr.bf16.mxu0 %v757
        %853 = vmatpush1.bf16.msra.mxu0 %v756
        %854 = vmatprep.subr.bf16.mxu0 %v761
        %855 = vmatpush1.bf16.msra.mxu0 %v760
        %856 = vmatprep.subr.bf16.mxu0 %v765
        %857 = vmatpush1.bf16.msra.mxu0 %v764
        %858 = vmatprep.subr.bf16.mxu0 %v769
        %859 = vmatpush1.bf16.msra.mxu0 %v768
        %860 = vmatprep.subr.bf16.mxu0 %v773
        %861 = vmatpush1.bf16.msra.mxu0 %v772
        %862 = vmatprep.subr.bf16.mxu0 %v777
        %863 = vmatpush1.bf16.msra.mxu0 %v776
        %864 = vmatprep.subr.bf16.mxu0 0
        %865 = vmatpush1.bf16.msra.mxu0 0
        %866 = vmatprep.subr.bf16.mxu0 0
        %867 = vmatpush1.bf16.msra.mxu0 0
        %868 = vmatprep.subr.bf16.mxu0 0
        %869 = vmatpush1.bf16.msra.mxu0 0
        %870 = vmatprep.subr.bf16.mxu0 0
        %871 = vmatpush1.bf16.msra.mxu0 0
        %872 = vmatprep.subr.bf16.mxu0 0
        %873 = vmatpush1.bf16.msra.mxu0 0
        %874 = vmatprep.subr.bf16.mxu0 0
        %875 = vmatpush1.bf16.msra.mxu0 0
        %876 = vmatprep.subr.bf16.mxu0 0
        %877 = vmatpush1.bf16.msra.mxu0 0
        %878 = vmatprep.subr.bf16.mxu0 0
        %879 = vmatpush1.bf16.msra.mxu0 0
        %880 = vmatprep.subr.bf16.mxu0 0
        %881 = vmatpush1.bf16.msra.mxu0 0
        %882 = vmatprep.mubr.bf16.mxu0 0
        %883 = vmatmul.mubr.bf16.gmra.mrb[0].mxu0 %v807
        %v884 = vpop.f32.mrb[0].mxu0
        %v885 = vadd.f32 %v657, %v884
        %v886 = vpop.f32.mrb[0].mxu0
        %v887 = vadd.f32 %v661, %v886
        %v888 = vpop.f32.mrb[0].mxu0
        %v889 = vpop.f32.mrb[0].mxu0
        %890 = vdwg.mxu0
        %v891 = vmax.f32 %v844, 0.0
        %v892 = vmax.f32 %v846, 0.0
        %v893 = vmax.f32 %v885, 0.0
        %v894 = vmax.f32 %v887, 0.0
        %v895 = vpack.c.bf16 %v891, %v891
        %v896 = vpack.c.bf16 %v892, %v892
        %v897 = vpack.c.bf16 %v893, %v893
        %v898 = vpack.c.bf16 %v894, %v894
        %v899 = vld [vmem:[#allocation8] sm:$0xf]
        %v900 = vld [vmem:[#allocation8 + $0x4] sm:$0xf]
        %v901 = vld [vmem:[#allocation8 + $0x8] sm:$0xf]
        %v902 = vld [vmem:[#allocation8 + $0xc] sm:$0xf]
        %v903 = vld [vmem:[#allocation8 + $0x10] sm:$0xf]
        %v904 = vld [vmem:[#allocation8 + $0x14] sm:$0xf]
        %v905 = vld [vmem:[#allocation8 + $0x18] sm:$0xf]
        %v906 = vld [vmem:[#allocation8 + $0x1c] sm:$0xf]
        %v907 = vld [vmem:[#allocation8 + $0x20] sm:$0xf]
        %v908 = vld [vmem:[#allocation8 + $0x24] sm:$0xf]
        %v909 = vld [vmem:[#allocation8 + $0x28] sm:$0xf]
        %v910 = vld [vmem:[#allocation8 + $0x2c] sm:$0xf]
        %v911 = vld [vmem:[#allocation8 + $0x30] sm:$0xf]
        %v912 = vld [vmem:[#allocation8 + $0x34] sm:$0xf]
        %v913 = vld [vmem:[#allocation8 + $0x38] sm:$0xf]
        %v914 = vld [vmem:[#allocation8 + $0x3c] sm:$0xf]
        %v915 = vld [vmem:[#allocation8 + $0x40] sm:$0xf]
        %v916 = vld [vmem:[#allocation8 + $0x44] sm:$0xf]
        %v917 = vld [vmem:[#allocation8 + $0x48] sm:$0xf]
        %v918 = vld [vmem:[#allocation8 + $0x4c] sm:$0xf]
        %v919 = vld [vmem:[#allocation8 + $0x50] sm:$0xf]
        %v920 = vld [vmem:[#allocation8 + $0x54] sm:$0xf]
        %v921 = vld [vmem:[#allocation8 + $0x58] sm:$0xf]
        %v922 = vld [vmem:[#allocation8 + $0x5c] sm:$0xf]
        %v923 = vld [vmem:[#allocation8 + $0x60] sm:$0xf]
        %v924 = vld [vmem:[#allocation8 + $0x64] sm:$0xf]
        %v925 = vld [vmem:[#allocation8 + $0x68] sm:$0xf]
        %v926 = vld [vmem:[#allocation8 + $0x6c] sm:$0xf]
        %v927 = vld [vmem:[#allocation8 + $0x70] sm:$0xf]
        %v928 = vld [vmem:[#allocation8 + $0x74] sm:$0xf]
        %v929 = vld [vmem:[#allocation8 + $0x78] sm:$0xf]
        %v930 = vld [vmem:[#allocation8 + $0x7c] sm:$0xf]
        %v931 = vld [vmem:[#allocation8 + $0x80] sm:$0xf]
        %v932 = vld [vmem:[#allocation8 + $0x84] sm:$0xf]
        %v933 = vld [vmem:[#allocation8 + $0x88] sm:$0xf]
        %v934 = vld [vmem:[#allocation8 + $0x8c] sm:$0xf]
        %v935 = vld [vmem:[#allocation8 + $0x90] sm:$0xf]
        %v936 = vld [vmem:[#allocation8 + $0x94] sm:$0xf]
        %v937 = vld [vmem:[#allocation8 + $0x98] sm:$0xf]
        %v938 = vld [vmem:[#allocation8 + $0x9c] sm:$0xf]
        %v939 = vld [vmem:[#allocation8 + $0xa0] sm:$0xf]
        %v940 = vld [vmem:[#allocation8 + $0xa4] sm:$0xf]
        %v941 = vld [vmem:[#allocation8 + $0xa8] sm:$0xf]
        %v942 = vld [vmem:[#allocation8 + $0xac] sm:$0xf]
        %v943 = vld [vmem:[#allocation8 + $0xb0] sm:$0xf]
        %v944 = vld [vmem:[#allocation8 + $0xb4] sm:$0xf]
        %v945 = vld [vmem:[#allocation8 + $0xb8] sm:$0xf]
        %v946 = vld [vmem:[#allocation8 + $0xbc] sm:$0xf]
        %v947 = vld [vmem:[#allocation8 + $0xc0] sm:$0xf]
        %v948 = vld [vmem:[#allocation8 + $0xc4] sm:$0xf]
        %v949 = vld [vmem:[#allocation8 + $0xc8] sm:$0xf]
        %v950 = vld [vmem:[#allocation8 + $0xcc] sm:$0xf]
        %v951 = vld [vmem:[#allocation8 + $0xd0] sm:$0xf]
        %v952 = vld [vmem:[#allocation8 + $0xd4] sm:$0xf]
        %v953 = vld [vmem:[#allocation8 + $0xd8] sm:$0xf]
        %v954 = vld [vmem:[#allocation8 + $0xdc] sm:$0xf]
        %v955 = vld [vmem:[%s10] sm:$0x1]
        %v957 = vlaneseq
        %v958 = vshrl.u32 %v957, 7
        %v959 = vsub.s32 0, %v958
        %v960 = vrot.slane %v955, %v959
        %v1018 = vunpack.c.l.b16 %v899
        %v1019 = vunpack.c.l.b16 %v900
        %v1020 = vunpack.c.l.b16 %v901
        %v1021 = vunpack.c.l.b16 %v902
        %v1022 = vunpack.c.l.b16 %v903
        %v1023 = vunpack.c.l.b16 %v904
        %v1024 = vunpack.c.l.b16 %v905
        %v1025 = vunpack.c.l.b16 %v906
        %v1026 = vunpack.c.l.b16 %v907
        %v1027 = vunpack.c.l.b16 %v908
        %v1028 = vunpack.c.l.b16 %v909
        %v1029 = vunpack.c.l.b16 %v910
        %v1030 = vunpack.c.l.b16 %v911
        %v1031 = vunpack.c.l.b16 %v912
        %v1032 = vunpack.c.l.b16 %v913
        %v1033 = vunpack.c.l.b16 %v914
        %v1034 = vunpack.c.l.b16 %v915
        %v1035 = vunpack.c.l.b16 %v916
        %v1036 = vunpack.c.l.b16 %v917
        %v1037 = vunpack.c.l.b16 %v918
        %v1038 = vunpack.c.l.b16 %v919
        %v1039 = vunpack.c.l.b16 %v920
        %v1040 = vunpack.c.l.b16 %v921
        %v1041 = vunpack.c.l.b16 %v922
        %v1042 = vunpack.c.l.b16 %v923
        %v1043 = vunpack.c.l.b16 %v924
        %v1044 = vunpack.c.l.b16 %v925
        %v1045 = vunpack.c.l.b16 %v926
        %v1046 = vunpack.c.l.b16 %v927
        %v1047 = vunpack.c.l.b16 %v928
        %v1048 = vunpack.c.l.b16 %v929
        %v1049 = vunpack.c.l.b16 %v930
        %v1050 = vunpack.c.l.b16 %v931
        %v1051 = vunpack.c.l.b16 %v932
        %v1052 = vunpack.c.l.b16 %v933
        %v1053 = vunpack.c.l.b16 %v934
        %v1054 = vunpack.c.l.b16 %v935
        %v1055 = vunpack.c.l.b16 %v936
        %v1056 = vunpack.c.l.b16 %v937
        %v1057 = vunpack.c.l.b16 %v938
        %v1058 = vunpack.c.l.b16 %v939
        %v1059 = vunpack.c.l.b16 %v940
        %v1060 = vunpack.c.l.b16 %v941
        %v1061 = vunpack.c.l.b16 %v942
        %v1062 = vunpack.c.l.b16 %v943
        %v1063 = vunpack.c.l.b16 %v944
        %v1064 = vunpack.c.l.b16 %v945
        %v1065 = vunpack.c.l.b16 %v946
        %v1066 = vunpack.c.l.b16 %v947
        %v1067 = vunpack.c.l.b16 %v948
        %v1068 = vunpack.c.l.b16 %v949
        %v1069 = vunpack.c.l.b16 %v950
        %v1070 = vunpack.c.l.b16 %v951
        %v1071 = vunpack.c.l.b16 %v952
        %v1072 = vunpack.c.l.b16 %v953
        %v1073 = vunpack.c.l.b16 %v954
        %v1074 = vpack.c.b16 %v1019, %v1018
        %v1075 = vpack.c.b16 %v1021, %v1020
        %v1076 = vpack.c.b16 %v1023, %v1022
        %v1077 = vpack.c.b16 %v1025, %v1024
        %v1078 = vpack.c.b16 %v1027, %v1026
        %v1079 = vpack.c.b16 %v1029, %v1028
        %v1080 = vpack.c.b16 %v1031, %v1030
        %v1081 = vpack.c.b16 %v1033, %v1032
        %v1082 = vpack.c.b16 %v1035, %v1034
        %v1083 = vpack.c.b16 %v1037, %v1036
        %v1084 = vpack.c.b16 %v1039, %v1038
        %v1085 = vpack.c.b16 %v1041, %v1040
        %v1086 = vpack.c.b16 %v1043, %v1042
        %v1087 = vpack.c.b16 %v1045, %v1044
        %v1088 = vpack.c.b16 %v1047, %v1046
        %v1089 = vpack.c.b16 %v1049, %v1048
        %v1090 = vpack.c.b16 %v1051, %v1050
        %v1091 = vpack.c.b16 %v1053, %v1052
        %v1092 = vpack.c.b16 %v1055, %v1054
        %v1093 = vpack.c.b16 %v1057, %v1056
        %v1094 = vpack.c.b16 %v1059, %v1058
        %v1095 = vpack.c.b16 %v1061, %v1060
        %v1096 = vpack.c.b16 %v1063, %v1062
        %v1097 = vpack.c.b16 %v1065, %v1064
        %v1098 = vpack.c.b16 %v1067, %v1066
        %v1099 = vpack.c.b16 %v1069, %v1068
        %v1100 = vpack.c.b16 %v1071, %v1070
        %v1101 = vpack.c.b16 %v1073, %v1072
        %vm1130 = vcmask 523264
        %v1132 = vsel %vm1130, %v898, 0
        %1134 = vmatprep.subr.bf16.mxu0 0
        %1135 = vmatpush1.bf16.msra.mxu0 %v1074
        %1136 = vmatprep.subr.bf16.mxu0 0
        %1137 = vmatpush1.bf16.msra.mxu0 %v1075
        %1138 = vmatprep.subr.bf16.mxu0 0
        %1139 = vmatpush1.bf16.msra.mxu0 %v1076
        %1140 = vmatprep.subr.bf16.mxu0 0
        %1141 = vmatpush1.bf16.msra.mxu0 %v1077
        %1142 = vmatprep.subr.bf16.mxu0 0
        %1143 = vmatpush1.bf16.msra.mxu0 %v1078
        %1144 = vmatprep.subr.bf16.mxu0 0
        %1145 = vmatpush1.bf16.msra.mxu0 %v1079
        %1146 = vmatprep.subr.bf16.mxu0 0
        %1147 = vmatpush1.bf16.msra.mxu0 %v1080
        %1148 = vmatprep.subr.bf16.mxu0 0
        %1149 = vmatpush1.bf16.msra.mxu0 %v1081
        %1150 = vmatprep.subr.bf16.mxu0 0
        %1151 = vmatpush1.bf16.msra.mxu0 %v1082
        %1152 = vmatprep.subr.bf16.mxu0 0
        %1153 = vmatpush1.bf16.msra.mxu0 %v1083
        %1154 = vmatprep.subr.bf16.mxu0 0
        %1155 = vmatpush1.bf16.msra.mxu0 %v1084
        %1156 = vmatprep.subr.bf16.mxu0 0
        %1157 = vmatpush1.bf16.msra.mxu0 %v1085
        %1158 = vmatprep.subr.bf16.mxu0 0
        %1159 = vmatpush1.bf16.msra.mxu0 %v1086
        %1160 = vmatprep.subr.bf16.mxu0 0
        %1161 = vmatpush1.bf16.msra.mxu0 %v1087
        %1162 = vmatprep.subr.bf16.mxu0 0
        %1163 = vmatpush1.bf16.msra.mxu0 %v1088
        %1164 = vmatprep.subr.bf16.mxu0 0
        %1165 = vmatpush1.bf16.msra.mxu0 %v1089
        %1166 = vmatprep.mubr.bf16.mxu0 %v896
        %1167 = vmatmul.mubr.bf16.gmra.mrb[0].mxu0 %v895
        %v1168 = vpop.f32.mrb[0].mxu0
        %v1169 = vadd.f32 %v960, %v1168
        %v1170 = vpop.f32.mrb[0].mxu0
        %v1171 = vpop.f32.mrb[0].mxu0
        %v1172 = vpop.f32.mrb[0].mxu0
        %1173 = vdwg.mxu0
        %1174 = vmatprep.subr.bf16.mxu0 0
        %1175 = vmatpush1.bf16.msra.mxu0 %v1090
        %1176 = vmatprep.subr.bf16.mxu0 0
        %1177 = vmatpush1.bf16.msra.mxu0 %v1091
        %1178 = vmatprep.subr.bf16.mxu0 0
        %1179 = vmatpush1.bf16.msra.mxu0 %v1092
        %1180 = vmatprep.subr.bf16.mxu0 0
        %1181 = vmatpush1.bf16.msra.mxu0 %v1093
        %1182 = vmatprep.subr.bf16.mxu0 0
        %1183 = vmatpush1.bf16.msra.mxu0 %v1094
        %1184 = vmatprep.subr.bf16.mxu0 0
        %1185 = vmatpush1.bf16.msra.mxu0 %v1095
        %1186 = vmatprep.subr.bf16.mxu0 0
        %1187 = vmatpush1.bf16.msra.mxu0 %v1096
        %1188 = vmatprep.subr.bf16.mxu0 0
        %1189 = vmatpush1.bf16.msra.mxu0 %v1097
        %1190 = vmatprep.subr.bf16.mxu0 0
        %1191 = vmatpush1.bf16.msra.mxu0 %v1098
        %1192 = vmatprep.subr.bf16.mxu0 0
        %1193 = vmatpush1.bf16.msra.mxu0 %v1099
        %1194 = vmatprep.subr.bf16.mxu0 0
        %1195 = vmatpush1.bf16.msra.mxu0 %v1100
        %1196 = vmatprep.subr.bf16.mxu0 0
        %1197 = vmatpush1.bf16.msra.mxu0 %v1101
        %1198 = vmatprep.subr.bf16.mxu0 0
        %1199 = vmatpush1.bf16.msra.mxu0 0
        %1200 = vmatprep.subr.bf16.mxu0 0
        %1201 = vmatpush1.bf16.msra.mxu0 0
        %1202 = vmatprep.subr.bf16.mxu0 0
        %1203 = vmatpush1.bf16.msra.mxu0 0
        %1204 = vmatprep.subr.bf16.mxu0 0
        %1205 = vmatpush1.bf16.msra.mxu0 0
        %1206 = vmatprep.mubr.bf16.mxu0 %v1132
        %1207 = vmatmul.mubr.bf16.gmra.mrb[0].mxu0 %v897
        %v1208 = vpop.f32.mrb[0].mxu0
        %v1209 = vadd.f32 %v1169, %v1208
        %v1210 = vpop.f32.mrb[0].mxu0
        %v1211 = vpop.f32.mrb[0].mxu0
        %v1212 = vpop.f32.mrb[0].mxu0
        %1213 = vdwg.mxu0
        %v1214 = vadd.f32 %v585, %v1209
        %1215 = vst.msk [vmem:[%s445] sm:$0xff] %vm448, %v1214
        %s1216 = sand.u32 %s274, 1
        %s1217 = scalar_lea.sflag [#allocation4], %s1216
        %s1218 = sand.u32 %s274, 1
        %s1219 = smul.addr %s1218, 8
        %s1220 = scalar_lea.vmem [#allocation10], %s1219
        // Predicated region
        $region81: #{block_forward.1} parent=63 // pred_check
          %p1221 = pneg %p284
        $region82: #{block_forward.1} parent=63 // pred_check_branch
          %1223 = sbr.rel (%p1221) target = $region84
        $region83: #{block_forward.1} parent=63 // pred_region
          %s1225 = ssub.s32 128, 128
          %1226 = vsyncadd %s1217, %s1225
          %s1227 = smul.addr %s30, 128
          %s1228 = scalar_lea.hbm %s11, %s1227
          %s1230 = sshll.u32 %s1220, 4
          %s1231 = int_to_ptr.vmem [resolvable:$true] %s1230
          %1233 = dma.vmem_to_hbm [thread:$0]  %s1231, 128, %s1228, %s1217
        $region84: #{block_forward.1} parent=63 // pred_fallthru
          _
      $region64: #{block_forward.1} parent=5 // pred_fallthru
        _
      %p1234 = scmp.le.s32.totalorder 2, %s25
      // Predicated region
      $region85: #{block_forward.1} parent=5 // pred_check
        %p1235 = pneg %p1234
      $region86: #{block_forward.1} parent=5 // pred_check_branch
        %1237 = sbr.rel (%p1235) target = $region88
      $region87: #{block_forward.1} parent=5 // pred_region
        %s1238 = ssub.s32 %s25, 2
        // Predicated region
        $region89: #{block_forward.1} parent=87 // pred_check
          %p1239 = pneg %p290
        $region90: #{block_forward.1} parent=87 // pred_check_branch
          %1241 = sbr.rel (%p1239) target = $region92
        $region91: #{block_forward.1} parent=87 // pred_region
          %s1242 = sand.u32 %s275, 1
          %s1243 = scalar_lea.sflag [#allocation4], %s1242
          %s1244 = sand.u32 %s275, 1
          %s1245 = smul.addr %s1244, 8
          %s1246 = scalar_lea.vmem [#allocation10], %s1245
          %1247 = dma.done %s1243, 128
        $region92: #{block_forward.1} parent=87 // pred_fallthru
          _
      $region88: #{block_forward.1} parent=5 // pred_fallthru
        _
    $region6: #{block_forward.1} parent=1 // loop_footer
      %s29 = sadd.s32 1, %s25
    $region7: #{block_forward.1} parent=1 // loop_footer_branch
      %24 = sbr.rel target = $region3
    $region8: #{block_forward.1} parent=1 // loop_exit
      _
    %1248 = vsyncpa [#allocation3], 1
    %s1249 = scalar_lea.sflag [#allocation3], 1
    %1250 = vsyncpa %s1249, 1
    %1251 = vsyncpa [#allocation6], 1
    %1252 = vsyncpa [#allocation9], 1
    %1253 = vsyncpa [#allocation4], 1
    %s1254 = scalar_lea.sflag [#allocation4], 1
    %1255 = vsyncpa %s1254, 1

</llo_original>
